<compile_context>
chip_gen: v7x
topology: tpu7x:2x2x1
jax: 0.10.0
libtpu: 0.0.40
codegen_flags: <defaults>
</compile_context>

<pallas_src>
import functools

import jax
import jax.numpy as jnp
from jax.experimental import pallas as pl
from jax.experimental.pallas import tpu as pltpu


def _round_up(a, b):
    return (a + b - 1) // b * b


def _cdiv(a, b):
    return (a + b - 1) // b


def _vmem_capacity_bytes():
    """Per-core VMEM capacity; conservative 64 MiB (v7x-sized) fallback."""
    try:
        return int(pltpu.get_tpu_info().vmem_capacity_bytes)
    except Exception:
        return 64 * 1024 * 1024


def _choose_tile(dim, target, align):
    """Pick a tile size for `dim`.

    Preference order:
      1. the whole (align-rounded) dim, if it fits under `target`;
      2. an exact divisor of the rounded dim near `target` (no zero padding);
      3. "balanced" ~target-sized tiles minimizing the final pad.
    """
    dim_al = _round_up(dim, align)
    target = max(align, target // align * align)
    if dim_al <= target:
        return dim_al
    cand = target
    while cand >= max(align, target // 2):
        if dim_al % cand == 0:
            return cand
        cand -= align
    n_tiles = _cdiv(dim_al, target)
    return _round_up(_cdiv(dim_al, n_tiles), align)


def _unembed_kernel_kred(x_ref, w_ref, b_ref, o_ref, acc_ref):
    """One (tm, tn) output tile; reduction over grid axis 2 (d_model / K)."""
    k = pl.program_id(2)

    @pl.when(k == 0)
    def _():
        acc_ref[...] = jnp.zeros_like(acc_ref)

    acc_ref[...] += jnp.dot(
        x_ref[...], w_ref[...], preferred_element_type=jnp.float32
    )

    @pl.when(k == pl.num_programs(2) - 1)
    def _():
        # Fused bias add in the epilogue; b_ref is (1, tn), broadcasts over rows.
        o_ref[...] = (acc_ref[...] + b_ref[...].astype(jnp.float32)).astype(
            o_ref.dtype
        )


def _unembed_kernel_single(x_ref, w_ref, b_ref, o_ref):
    """One (tm, tn) output tile; whole K reduction inside one block."""
    acc = jnp.dot(x_ref[...], w_ref[...], preferred_element_type=jnp.float32)
    o_ref[...] = (acc + b_ref[...].astype(jnp.float32)).astype(o_ref.dtype)


@functools.partial(
    jax.jit, static_argnames=("tm", "tn", "tk", "cast_bf16", "out_dtype")
)
def unembedding_forward(
    x, w_u, b_u, *, tm=None, tn=None, tk=None, cast_bf16=True, out_dtype=None
):
    """x: [batch, seq, d_model], w_u: [d_model, d_vocab], b_u: [d_vocab].

    Note: for training-loss-grade logits pass cast_bf16=False; for maximum
    HBM savings store W_U in bf16 (no per-call cast) and use out_dtype=bf16.
    """
    batch, seq, d_model = x.shape
    d_vocab = w_u.shape[1]
    m = batch * seq
    out_dtype = jnp.dtype(out_dtype) if out_dtype is not None else x.dtype

    # bf16 operands halve HBM traffic and double MXU throughput; the matmul
    # still accumulates in f32.
    compute_dtype = jnp.bfloat16 if cast_bf16 else x.dtype

    # ---- Generation-aware tile targets (trace-time constants) -------------
    vmem_cap = _vmem_capacity_bytes()
    big_vmem = vmem_cap >= 96 * 1024 * 1024  # v5e / v6e: 128 MiB per core
    tm_t = tm if tm is not None else (2048 if big_vmem else 1024)
    tn_t = tn if tn is not None else (2048 if big_vmem else 1024)
    tk_t = tk if tk is not None else 512

    m_al = _round_up(m, 16)                 # bf16 sublane packing
    tm = _choose_tile(m, tm_t, 16)
    tk = _choose_tile(d_model, tk_t, 128)
    tn = _choose_tile(d_vocab, tn_t, 128)

    # Megacore (v7x has 2 TCs): with a single M tile keep >=2 tiles on the
    # parallel V axis so both cores stream disjoint halves of W_U.
    v_al = _round_up(d_vocab, 128)
    if _cdiv(m_al, tm) == 1 and v_al > 128 and tn >= v_al:
        tn = _choose_tile(d_vocab, max(128, tn // 2), 128)

    m_pad = _round_up(m_al, tm)
    k_pad = _round_up(_round_up(d_model, 128), tk)
    v_pad = _round_up(v_al, tn)

    # ---- Operand prep (cast only if needed; pad only if needed) -----------
    x2d = x.reshape(m, d_model)
    if x2d.dtype != compute_dtype:
        x2d = x2d.astype(compute_dtype)
    # Store W_U in bf16 outside the step function and this cast disappears.
    w = w_u if w_u.dtype == compute_dtype else w_u.astype(compute_dtype)
    b2d = b_u.reshape(1, d_vocab)

    if (m_pad, k_pad) != (m, d_model):
        x2d = jnp.pad(x2d, ((0, m_pad - m), (0, k_pad - d_model)))
    if (k_pad, v_pad) != (d_model, d_vocab):
        # Divisor-based tk/tn avoid this copy for typical (128-aligned) shapes.
        w = jnp.pad(w, ((0, k_pad - d_model), (0, v_pad - d_vocab)))
    if v_pad != d_vocab:
        b2d = jnp.pad(b2d, ((0, 0), (0, v_pad - d_vocab)))

    n_m = m_pad // tm
    n_v = v_pad // tn
    n_k = k_pad // tk

    x_bytes = jnp.dtype(compute_dtype).itemsize
    b_bytes = jnp.dtype(b2d.dtype).itemsize
    o_bytes = jnp.dtype(out_dtype).itemsize

    # Explicit VMEM budget: double-buffered inputs/outputs + f32 accumulator,
    # capped per generation (v7x only has 64 MiB per core).
    vmem_needed = (
        2 * tm * tk * x_bytes           # x tile (double-buffered)
        + 2 * tk * tn * x_bytes         # W_U tile (double-buffered)
        + 2 * tn * b_bytes              # bias tile
        + 2 * tm * tn * o_bytes         # output tile (double-buffered)
        + (tm * tn * 4 if n_k > 1 else 0)  # f32 accumulator scratch
    )
    vmem_limit = int(
        min(
            max(vmem_needed + vmem_needed // 4, 32 * 1024 * 1024),
            (vmem_cap * 9) // 10,
        )
    )

    # Honest traffic estimate: x is re-read once per V tile, W_U once per M
    # tile, the logits are written exactly once.
    cost = pl.CostEstimate(
        flops=2 * m * d_model * d_vocab,
        transcendentals=0,
        bytes_accessed=(
            n_v * m * d_model * x_bytes
            + n_m * d_model * d_vocab * x_bytes
            + m * d_vocab * o_bytes
            + n_m * d_vocab * b_bytes
        ),
    )

    if n_k == 1:
        # Whole reduction fits one K block: drop the K grid axis entirely.
        out2d = pl.pallas_call(
            _unembed_kernel_single,
            out_shape=jax.ShapeDtypeStruct((m_pad, v_pad), out_dtype),
            grid_spec=pltpu.PrefetchScalarGridSpec(
                num_scalar_prefetch=0,
                grid=(n_m, n_v),
                in_specs=[
                    pl.BlockSpec((tm, tk), lambda i, j: (i, 0)),   # x tile
                    pl.BlockSpec((tk, tn), lambda i, j: (0, j)),   # W_U tile
                    pl.BlockSpec((1, tn), lambda i, j: (0, j)),    # bias tile
                ],
                out_specs=pl.BlockSpec((tm, tn), lambda i, j: (i, j)),
            ),
            compiler_params=pltpu.CompilerParams(
                dimension_semantics=("parallel", "parallel"),
                vmem_limit_bytes=vmem_limit,
            ),
            cost_estimate=cost,
        )(x2d, w, b2d)
    else:
        out2d = pl.pallas_call(
            _unembed_kernel_kred,
            out_shape=jax.ShapeDtypeStruct((m_pad, v_pad), out_dtype),
            grid_spec=pltpu.PrefetchScalarGridSpec(
                num_scalar_prefetch=0,
                grid=(n_m, n_v, n_k),
                in_specs=[
                    pl.BlockSpec((tm, tk), lambda i, j, k: (i, k)),  # x tile
                    pl.BlockSpec((tk, tn), lambda i, j, k: (k, j)),  # W_U tile
                    pl.BlockSpec((1, tn), lambda i, j, k: (0, j)),   # bias tile
                ],
                out_specs=pl.BlockSpec((tm, tn), lambda i, j, k: (i, j)),
                scratch_shapes=[pltpu.VMEM((tm, tn), jnp.float32)],
            ),
            compiler_params=pltpu.CompilerParams(
                dimension_semantics=("parallel", "parallel", "arbitrary"),
                vmem_limit_bytes=vmem_limit,
            ),
            cost_estimate=cost,
        )(x2d, w, b2d)

    return out2d[:m, :d_vocab].reshape(batch, seq, d_vocab)


if __name__ == "__main__":
    key = jax.random.PRNGKey(0)
    init_range = 0.02

    # ---- Test 1: small config (no-K-axis path + K/V alignment padding) ----
    batch, seq_len, d_model, d_vocab = 2, 8, 32, 128
    k_x, k_w, key = jax.random.split(key, 3)
    w_u = init_range * jax.random.normal(k_w, (d_model, d_vocab), jnp.float32)
    b_u = jnp.zeros((d_vocab,), jnp.float32)
    x = jax.random.normal(k_x, (batch, seq_len, d_model), jnp.float32)

    logits = unembedding_forward(x, w_u, b_u)
    jax.block_until_ready(logits)

    ref = jnp.einsum("bsd,dv->bsv", x, w_u) + b_u
    assert logits.shape == (batch, seq_len, d_vocab)
    # bf16 operands -> loosened tolerance (accumulation stays f32).
    assert jnp.allclose(logits, ref, atol=1e-2, rtol=1e-2)

    # ---- Test 2: larger d_model (K-reduction grid axis, divisor tk=512) ----
    batch2, seq2, d_model2, d_vocab2 = 2, 16, 1536, 512
    k_x2, k_w2, key = jax.random.split(key, 3)
    w_u2 = init_range * jax.random.normal(k_w2, (d_model2, d_vocab2), jnp.float32)
    b_u2 = 0.1 * jax.random.normal(key, (d_vocab2,), jnp.float32)
    x2 = jax.random.normal(k_x2, (batch2, seq2, d_model2), jnp.float32)

    logits2 = unembedding_forward(x2, w_u2, b_u2)
    jax.block_until_ready(logits2)

    ref2 = jnp.einsum("bsd,dv->bsv", x2, w_u2) + b_u2
    assert logits2.shape == (batch2, seq2, d_vocab2)
    assert jnp.allclose(logits2, ref2, atol=3e-2, rtol=2e-2)

    print("KERNEL_OK")
</pallas_src>

<mosaic_0001>
module attributes {stable_mosaic.version = 11 : i64} {
  func.func @_unembed_kernel_single(%arg0: i32, %arg1: i32, %arg2: memref<16x128xbf16, #tpu.memory_space<vmem>>, %arg3: memref<128x128xbf16, #tpu.memory_space<vmem>>, %arg4: memref<1x128xf32, #tpu.memory_space<vmem>>, %arg5: memref<16x128xf32, #tpu.memory_space<vmem>>) attributes {dimension_semantics = [#tpu.dimension_semantics<parallel>, #tpu.dimension_semantics<parallel>], iteration_bounds = array<i64: 1, 1>, scalar_prefetch = 0 : i64, scratch_operands = 0 : i64, tpu.core_type = #tpu.core_type<tc>, window_params = [{transform_indices = @transform_0, window_bounds = array<i64: 16, 128>}, {transform_indices = @transform_1, window_bounds = array<i64: 128, 128>}, {transform_indices = @transform_2, window_bounds = array<i64: 1, 128>}, {transform_indices = @transform_3, window_bounds = array<i64: 16, 128>}]} {
    %c0 = arith.constant 0 : index
    %c0_0 = arith.constant 0 : index
    %0 = vector.load %arg2[%c0, %c0_0] : memref<16x128xbf16, #tpu.memory_space<vmem>>, vector<16x128xbf16>
    %c0_1 = arith.constant 0 : index
    %c0_2 = arith.constant 0 : index
    %1 = vector.load %arg3[%c0_1, %c0_2] : memref<128x128xbf16, #tpu.memory_space<vmem>>, vector<128x128xbf16>
    %cst = arith.constant dense<0.000000e+00> : vector<16x128xf32>
    %2 = tpu.matmul %0, %1, %cst {dimension_numbers = #tpu.dot_dimension_numbers<[1], [0], [0], [1], [0, 0, 1, 1], [], []>} : vector<16x128xbf16>, vector<128x128xbf16>, vector<16x128xf32> -> vector<16x128xf32>
    %c0_3 = arith.constant 0 : index
    %c0_4 = arith.constant 0 : index
    %3 = vector.load %arg4[%c0_3, %c0_4] : memref<1x128xf32, #tpu.memory_space<vmem>>, vector<1x128xf32>
    %4 = vector.broadcast %3 : vector<1x128xf32> to vector<16x128xf32>
    %5 = arith.addf %2, %4 : vector<16x128xf32>
    %c0_5 = arith.constant 0 : index
    %c0_6 = arith.constant 0 : index
    %6 = vector.load %arg5[%c0_5, %c0_6] : memref<16x128xf32, #tpu.memory_space<vmem>>, vector<16x128xf32>
    tpu.vector_store %arg5[%c0_5, %c0_6], %5 {strides = array<i32>} : memref<16x128xf32, #tpu.memory_space<vmem>>, vector<16x128xf32>,
    return
  }
  func.func @transform_0(%arg0: i32, %arg1: i32) -> (i32, i32) {
    %c0_i32 = arith.constant 0 : i32
    %c0_i32_0 = arith.constant 0 : i32
    return %arg0, %c0_i32 : i32, i32
  }
  func.func @transform_1(%arg0: i32, %arg1: i32) -> (i32, i32) {
    %c0_i32 = arith.constant 0 : i32
    %c0_i32_0 = arith.constant 0 : i32
    return %c0_i32, %arg1 : i32, i32
  }
  func.func @transform_2(%arg0: i32, %arg1: i32) -> (i32, i32) {
    %c0_i32 = arith.constant 0 : i32
    %c0_i32_0 = arith.constant 0 : i32
    return %c0_i32, %arg1 : i32, i32
  }
  func.func @transform_3(%arg0: i32, %arg1: i32) -> (i32, i32) {
    %c0_i32 = arith.constant 0 : i32
    return %arg0, %arg1 : i32, i32
  }
}

</mosaic_0001>

<llo_original>
// kernel: unembedding_forward.1
$region0: #{unembedding_forward.1}
  #allocation0 [shape = 'u32[]', space=smem, size = 0x4, offset = 0x4, fixed_abs, tag = 'smem constant byte address 0x4 - core index']
  #allocation1 [shape = 'u32[144,128]{1,0:T(1,128)}', space=vmem, size = 0x12000, scoped, tag = 'internal scratch']
  %s0 = inlined_call_operand.vmem [shape: bf16[16,128], index: 0, kind: input, shape index: {}]
  %s1 = inlined_call_operand.vmem [shape: bf16[128,128], index: 1, kind: input, shape index: {}]
  %s2 = inlined_call_operand.vmem [shape: f32[1,128], index: 2, kind: input, shape index: {}]
  %s3 = inlined_call_operand.hbm [shape: f32[16,128], index: 3, kind: output, shape index: {}]
  %s4 = sld [smem:[#allocation0]]
  $region22: #{unembedding_forward.1} parent=0
    _
  %s6 = ssub.s32 1, %s4
  %s7 = scalar_select 0, %s6, %s4
  $region1: #{unembedding_forward.1} parent=0
    #allocation2 [shape = 'u8[8192]{0}', space=vmem, size = 0x2000, scoped, tag = 'output window, operand 0, single buffered']
    #allocation3 [shape = 's32[1]{0}', space=sflag, size = 0x4, scoped, tag = 'scoped memory for unembedding_forward.1']
    %8 = vsyncpa [#allocation3], 0
    // Predicated region
    $region2: #{unembedding_forward.1} parent=1 // pred_check
      _
    $region3: #{unembedding_forward.1} parent=1 // pred_check_branch
      %10 = sbr.rel (0) target = $region5
    $region4: #{unembedding_forward.1} parent=1 // pred_region
      _
    $region5: #{unembedding_forward.1} parent=1 // pred_fallthru
      _
    // Predicated region
    $region6: #{unembedding_forward.1} parent=1 // pred_check
      _
    $region7: #{unembedding_forward.1} parent=1 // pred_check_branch
      %12 = sbr.rel (0) target = $region9
    $region8: #{unembedding_forward.1} parent=1 // pred_region
      _
    $region9: #{unembedding_forward.1} parent=1 // pred_fallthru
      _
    // Predicated region
    $region10: #{unembedding_forward.1} parent=1 // pred_check
      _
    $region11: #{unembedding_forward.1} parent=1 // pred_check_branch
      %14 = sbr.rel (0) target = $region13
    $region12: #{unembedding_forward.1} parent=1 // pred_region
      _
    $region13: #{unembedding_forward.1} parent=1 // pred_fallthru
      _
    %v16 = vld [vmem:[%s0] sm:$0xf]
    %v17 = vld [vmem:[%s0 + $0x4] sm:$0xf]
    %v18 = vld [vmem:[%s1] sm:$0xf]
    %v19 = vld [vmem:[%s1 + $0x4] sm:$0xf]
    %v20 = vld [vmem:[%s1 + $0x8] sm:$0xf]
    %v21 = vld [vmem:[%s1 + $0xc] sm:$0xf]
    %v22 = vld [vmem:[%s1 + $0x10] sm:$0xf]
    %v23 = vld [vmem:[%s1 + $0x14] sm:$0xf]
    %v24 = vld [vmem:[%s1 + $0x18] sm:$0xf]
    %v25 = vld [vmem:[%s1 + $0x1c] sm:$0xf]
    %v26 = vld [vmem:[%s1 + $0x20] sm:$0xf]
    %v27 = vld [vmem:[%s1 + $0x24] sm:$0xf]
    %v28 = vld [vmem:[%s1 + $0x28] sm:$0xf]
    %v29 = vld [vmem:[%s1 + $0x2c] sm:$0xf]
    %v30 = vld [vmem:[%s1 + $0x30] sm:$0xf]
    %v31 = vld [vmem:[%s1 + $0x34] sm:$0xf]
    %v32 = vld [vmem:[%s1 + $0x38] sm:$0xf]
    %v33 = vld [vmem:[%s1 + $0x3c] sm:$0xf]
    %v34 = vld [vmem:[%s2] sm:$0x1]
    %v36 = vlaneseq
    %v37 = vshrl.u32 %v36, 7
    %v38 = vsub.s32 0, %v37
    %v39 = vrot.slane %v34, %v38
    %v43 = vunpack.c.l.b16 %v16
    %v44 = vunpack.c.l.b16 %v17
    %v45 = vpack.c.b16 %v44, %v43
    %v63 = vunpack.c.l.b16 %v18
    %v64 = vunpack.c.l.b16 %v19
    %v65 = vunpack.c.l.b16 %v20
    %v66 = vunpack.c.l.b16 %v21
    %v67 = vunpack.c.l.b16 %v22
    %v68 = vunpack.c.l.b16 %v23
    %v69 = vunpack.c.l.b16 %v24
    %v70 = vunpack.c.l.b16 %v25
    %v71 = vunpack.c.l.b16 %v26
    %v72 = vunpack.c.l.b16 %v27
    %v73 = vunpack.c.l.b16 %v28
    %v74 = vunpack.c.l.b16 %v29
    %v75 = vunpack.c.l.b16 %v30
    %v76 = vunpack.c.l.b16 %v31
    %v77 = vunpack.c.l.b16 %v32
    %v78 = vunpack.c.l.b16 %v33
    %v79 = vpack.c.b16 %v64, %v63
    %v80 = vpack.c.b16 %v66, %v65
    %v81 = vpack.c.b16 %v68, %v67
    %v82 = vpack.c.b16 %v70, %v69
    %v83 = vpack.c.b16 %v72, %v71
    %v84 = vpack.c.b16 %v74, %v73
    %v85 = vpack.c.b16 %v76, %v75
    %v86 = vpack.c.b16 %v78, %v77
    %95 = vmatprep.subr.bf16.mxu0 0
    %96 = vmatpush1.bf16.msra.mxu0 %v79
    %97 = vmatprep.subr.bf16.mxu0 0
    %98 = vmatpush1.bf16.msra.mxu0 %v80
    %99 = vmatprep.subr.bf16.mxu0 0
    %100 = vmatpush1.bf16.msra.mxu0 %v81
    %101 = vmatprep.subr.bf16.mxu0 0
    %102 = vmatpush1.bf16.msra.mxu0 %v82
    %103 = vmatprep.subr.bf16.mxu0 0
    %104 = vmatpush1.bf16.msra.mxu0 %v83
    %105 = vmatprep.subr.bf16.mxu0 0
    %106 = vmatpush1.bf16.msra.mxu0 %v84
    %107 = vmatprep.subr.bf16.mxu0 0
    %108 = vmatpush1.bf16.msra.mxu0 %v85
    %109 = vmatprep.subr.bf16.mxu0 0
    %110 = vmatpush1.bf16.msra.mxu0 %v86
    %111 = vmatprep.subr.bf16.mxu0 0
    %112 = vmatpush1.bf16.msra.mxu0 0
    %113 = vmatprep.subr.bf16.mxu0 0
    %114 = vmatpush1.bf16.msra.mxu0 0
    %115 = vmatprep.subr.bf16.mxu0 0
    %116 = vmatpush1.bf16.msra.mxu0 0
    %117 = vmatprep.subr.bf16.mxu0 0
    %118 = vmatpush1.bf16.msra.mxu0 0
    %119 = vmatprep.subr.bf16.mxu0 0
    %120 = vmatpush1.bf16.msra.mxu0 0
    %121 = vmatprep.subr.bf16.mxu0 0
    %122 = vmatpush1.bf16.msra.mxu0 0
    %123 = vmatprep.subr.bf16.mxu0 0
    %124 = vmatpush1.bf16.msra.mxu0 0
    %125 = vmatprep.subr.bf16.mxu0 0
    %126 = vmatpush1.bf16.msra.mxu0 0
    %127 = vmatprep.mubr.bf16.mxu0 0
    %128 = vmatmul.mubr.bf16.gmra.mrb[0].mxu0 %v45
    %v129 = vpop.f32.mrb[0].mxu0
    %v130 = vadd.f32 %v39, %v129
    %v131 = vpop.f32.mrb[0].mxu0
    %v132 = vpop.f32.mrb[0].mxu0
    %v133 = vadd.f32 %v39, %v132
    %v134 = vpop.f32.mrb[0].mxu0
    %135 = vdwg.mxu0
    %136 = vst [vmem:[#allocation2] sm:$0xff] %v130
    %137 = vst [vmem:[#allocation2 + $0x8] sm:$0xff] %v133
    // Predicated region
    $region14: #{unembedding_forward.1} parent=1 // pred_check
      _
    $region15: #{unembedding_forward.1} parent=1 // pred_check_branch
      %139 = sbr.rel (0) target = $region17
    $region16: #{unembedding_forward.1} parent=1 // pred_region
      %s141 = ssub.s32 256, 256
      %142 = vsyncadd [#allocation3], %s141
      %s143 = sshll.u32 [#allocation2], 4
      %s144 = int_to_ptr.vmem [resolvable:$true] %s143
      %149 = dma.vmem_to_hbm [thread:$0]  %s144, 256, %s3, [#allocation3], 128, 128, 8
    $region17: #{unembedding_forward.1} parent=1 // pred_fallthru
      _
    // Predicated region
    $region18: #{unembedding_forward.1} parent=1 // pred_check
      _
    $region19: #{unembedding_forward.1} parent=1 // pred_check_branch
      %151 = sbr.rel (0) target = $region21
    $region20: #{unembedding_forward.1} parent=1 // pred_region
      %152 = dma.done [#allocation3], 256
    $region21: #{unembedding_forward.1} parent=1 // pred_fallthru
      _
    %153 = vsyncpa [#allocation3], 1

</llo_original>
